<compile_context>
chip_gen: v7x
topology: tpu7x:2x2x1
jax: 0.10.0
libtpu: 0.0.40
codegen_flags: <defaults>
</compile_context>

<pallas_src>
import math
import functools

import jax
import jax.numpy as jnp
from jax.experimental import pallas as pl
from jax.experimental.pallas import tpu as pltpu


# ---------------------------------------------------------------------------
# Global precision / tiling knobs
# ---------------------------------------------------------------------------

_MXU_INPUT_DTYPE = jnp.bfloat16     # MXU operand dtype (f32 accumulation)
_PARAM_DTYPE = jnp.bfloat16         # weights + KV cache storage dtype
_ACT_DTYPE = jnp.bfloat16           # residual stream / activations dtype

# 512/1024 bf16 tiles: ~6 MiB double-buffered, fine on v7x's 64 MiB VMEM and
# comfortably HBM-efficient on v5e/v6e.  128-aligned for all MXU generations.
_TM, _TN, _TK = 512, 512, 1024
_NORM_TM = 256
_ATTN_TQ, _ATTN_TK = 128, 512

# Explicit scoped-VMEM budget: above the 16/32 MiB defaults, with headroom
# under v7x's 64 MiB physical VMEM.
_VMEM_LIMIT_BYTES = 48 * 1024 * 1024


def _round_up(x, m):
    return ((x + m - 1) // m) * m


def _cdiv(a, b):
    return (a + b - 1) // b


def _pick_tile(n, target, align):
    """Largest `align`-multiple <= target that divides n (avoids padding);
    full extent if n <= target; falls back to `target` (padding) otherwise."""
    if n <= target:
        return n
    t = (target // align) * align
    while t >= align:
        if n % t == 0:
            return t
        t -= align
    return target


# ---------------------------------------------------------------------------
# Tiled matmul kernel (K-reduction with f32 VMEM accumulator)
# ---------------------------------------------------------------------------

def _matmul_kernel(x_ref, w_ref, o_ref, acc_ref):
    @pl.when(pl.program_id(2) == 0)
    def _():
        acc_ref[...] = jnp.zeros_like(acc_ref)

    acc_ref[...] += jnp.dot(
        x_ref[...].astype(_MXU_INPUT_DTYPE),
        w_ref[...].astype(_MXU_INPUT_DTYPE),
        preferred_element_type=jnp.float32,
    )

    @pl.when(pl.program_id(2) == pl.num_programs(2) - 1)
    def _():
        o_ref[...] = acc_ref[...].astype(o_ref.dtype)


def pallas_matmul(x, w, out_dtype=None):
    """x: (M, K), w: (K, N) -> (M, N); bf16 MXU inputs, f32 accumulation."""
    M, K = x.shape
    K2, N = w.shape
    assert K == K2
    out_dtype = out_dtype or x.dtype
    tm = _pick_tile(M, _TM, 8)
    tn = _pick_tile(N, _TN, 128)
    tk = _pick_tile(K, _TK, 128)
    Mp, Np, Kp = _round_up(M, tm), _round_up(N, tn), _round_up(K, tk)
    # TODO(synk): if a weight dim ever hits the padding fallback, hoist the
    # weight padding to init time instead of re-padding per call.
    xp = jnp.pad(x, ((0, Mp - M), (0, Kp - K))) if (Mp, Kp) != (M, K) else x
    wp = jnp.pad(w, ((0, Kp - K), (0, Np - N))) if (Kp, Np) != (K, N) else w

    bpe = 2  # bf16 operand bytes
    out = pl.pallas_call(
        _matmul_kernel,
        out_shape=jax.ShapeDtypeStruct((Mp, Np), out_dtype),
        grid=(Mp // tm, Np // tn, Kp // tk),
        in_specs=[
            pl.BlockSpec((tm, tk), lambda i, j, k: (i, k)),
            pl.BlockSpec((tk, tn), lambda i, j, k: (k, j)),
        ],
        out_specs=pl.BlockSpec((tm, tn), lambda i, j, k: (i, j)),
        scratch_shapes=[pltpu.VMEM((tm, tn), jnp.float32)],
        compiler_params=pltpu.CompilerParams(
            dimension_semantics=("parallel", "parallel", "arbitrary"),
            vmem_limit_bytes=_VMEM_LIMIT_BYTES,
        ),
        cost_estimate=pl.CostEstimate(
            flops=2 * Mp * Np * Kp,
            transcendentals=0,
            bytes_accessed=bpe * (Mp * Kp + Kp * Np + Mp * Np),
        ),
    )(xp, wp)
    return out[:M, :N] if (Mp, Np) != (M, N) else out


# ---------------------------------------------------------------------------
# Fused SwiGLU gate projection:  g = silu(x @ w1) * (x @ w3)
# (shared x stream, two accumulators, gate applied once in finalize)
# ---------------------------------------------------------------------------

def _gate_matmul_kernel(x_ref, w1_ref, w3_ref, o_ref, acc1_ref, acc3_ref):
    @pl.when(pl.program_id(2) == 0)
    def _():
        acc1_ref[...] = jnp.zeros_like(acc1_ref)
        acc3_ref[...] = jnp.zeros_like(acc3_ref)

    x = x_ref[...].astype(_MXU_INPUT_DTYPE)
    acc1_ref[...] += jnp.dot(x, w1_ref[...].astype(_MXU_INPUT_DTYPE),
                             preferred_element_type=jnp.float32)
    acc3_ref[...] += jnp.dot(x, w3_ref[...].astype(_MXU_INPUT_DTYPE),
                             preferred_element_type=jnp.float32)

    @pl.when(pl.program_id(2) == pl.num_programs(2) - 1)
    def _():
        a = acc1_ref[...]
        o_ref[...] = (a * jax.nn.sigmoid(a) * acc3_ref[...]).astype(o_ref.dtype)


def pallas_gate_matmul(x, w1, w3):
    """silu(x @ w1) * (x @ w3) without ever writing h1/h3 to HBM."""
    M, K = x.shape
    K2, N = w1.shape
    assert K == K2 and w3.shape == w1.shape
    tm = _pick_tile(M, _TM, 8)
    tn = _pick_tile(N, _TN, 128)
    tk = _pick_tile(K, _TK, 128)
    Mp, Np, Kp = _round_up(M, tm), _round_up(N, tn), _round_up(K, tk)
    xp = jnp.pad(x, ((0, Mp - M), (0, Kp - K))) if (Mp, Kp) != (M, K) else x

    def pad_w(w):
        return jnp.pad(w, ((0, Kp - K), (0, Np - N))) if (Kp, Np) != (K, N) else w

    w1p, w3p = pad_w(w1), pad_w(w3)

    out = pl.pallas_call(
        _gate_matmul_kernel,
        out_shape=jax.ShapeDtypeStruct((Mp, Np), x.dtype),
        grid=(Mp // tm, Np // tn, Kp // tk),
        in_specs=[
            pl.BlockSpec((tm, tk), lambda i, j, k: (i, k)),
            pl.BlockSpec((tk, tn), lambda i, j, k: (k, j)),
            pl.BlockSpec((tk, tn), lambda i, j, k: (k, j)),
        ],
        out_specs=pl.BlockSpec((tm, tn), lambda i, j, k: (i, j)),
        scratch_shapes=[pltpu.VMEM((tm, tn), jnp.float32),
                        pltpu.VMEM((tm, tn), jnp.float32)],
        compiler_params=pltpu.CompilerParams(
            dimension_semantics=("parallel", "parallel", "arbitrary"),
            vmem_limit_bytes=_VMEM_LIMIT_BYTES,
        ),
        cost_estimate=pl.CostEstimate(
            flops=4 * Mp * Np * Kp,
            transcendentals=Mp * Np,
            bytes_accessed=2 * (Mp * Kp + 2 * Kp * Np + Mp * Np),
        ),
    )(xp, w1p, w3p)
    return out[:M, :N] if (Mp, Np) != (M, N) else out


# ---------------------------------------------------------------------------
# Row-tiled RMSNorm (plain, and fused residual-add variant)
# ---------------------------------------------------------------------------

def _rmsnorm_kernel(x_ref, w_ref, o_ref, *, eps):
    x = x_ref[...].astype(jnp.float32)
    ms = jnp.mean(x * x, axis=-1, keepdims=True)
    o_ref[...] = (x * jax.lax.rsqrt(ms + eps) * w_ref[...]).astype(o_ref.dtype)


def pallas_rmsnorm(x, weight, eps=1e-6):
    orig_shape = x.shape
    dim = orig_shape[-1]
    x2 = x.reshape(-1, dim)
    M = x2.shape[0]
    tm = min(M, _NORM_TM)
    Mp = _round_up(M, tm)
    if Mp != M:
        x2 = jnp.pad(x2, ((0, Mp - M), (0, 0)))
    w2 = weight.reshape(1, dim)

    out = pl.pallas_call(
        functools.partial(_rmsnorm_kernel, eps=eps),
        out_shape=jax.ShapeDtypeStruct((Mp, dim), x.dtype),
        grid=(Mp // tm,),
        in_specs=[
            pl.BlockSpec((tm, dim), lambda i: (i, 0)),
            pl.BlockSpec((1, dim), lambda i: (0, 0)),
        ],
        out_specs=pl.BlockSpec((tm, dim), lambda i: (i, 0)),
        compiler_params=pltpu.CompilerParams(
            dimension_semantics=("parallel",),
            vmem_limit_bytes=_VMEM_LIMIT_BYTES,
        ),
    )(x2, w2)
    if Mp != M:
        out = out[:M]
    return out.reshape(orig_shape)


def _add_rmsnorm_kernel(x_ref, r_ref, w_ref, h_ref, o_ref, *, eps):
    h = x_ref[...].astype(jnp.float32) + r_ref[...].astype(jnp.float32)
    h_ref[...] = h.astype(h_ref.dtype)
    ms = jnp.mean(h * h, axis=-1, keepdims=True)
    o_ref[...] = (h * jax.lax.rsqrt(ms + eps) * w_ref[...]).astype(o_ref.dtype)


def pallas_add_rmsnorm(x, r, weight, eps=1e-6):
    """Returns (h, rmsnorm(h) * weight) with h = x + r, fused in one pass."""
    orig_shape = x.shape
    dim = orig_shape[-1]
    x2 = x.reshape(-1, dim)
    r2 = r.reshape(-1, dim)
    M = x2.shape[0]
    tm = min(M, _NORM_TM)
    Mp = _round_up(M, tm)
    if Mp != M:
        x2 = jnp.pad(x2, ((0, Mp - M), (0, 0)))
        r2 = jnp.pad(r2, ((0, Mp - M), (0, 0)))
    w2 = weight.reshape(1, dim)

    h, o = pl.pallas_call(
        functools.partial(_add_rmsnorm_kernel, eps=eps),
        out_shape=(jax.ShapeDtypeStruct((Mp, dim), x.dtype),
                   jax.ShapeDtypeStruct((Mp, dim), x.dtype)),
        grid=(Mp // tm,),
        in_specs=[
            pl.BlockSpec((tm, dim), lambda i: (i, 0)),
            pl.BlockSpec((tm, dim), lambda i: (i, 0)),
            pl.BlockSpec((1, dim), lambda i: (0, 0)),
        ],
        out_specs=(pl.BlockSpec((tm, dim), lambda i: (i, 0)),
                   pl.BlockSpec((tm, dim), lambda i: (i, 0))),
        compiler_params=pltpu.CompilerParams(
            dimension_semantics=("parallel",),
            vmem_limit_bytes=_VMEM_LIMIT_BYTES,
        ),
    )(x2, r2, w2)
    if Mp != M:
        h, o = h[:M], o[:M]
    return h.reshape(orig_shape), o.reshape(orig_shape)


# ---------------------------------------------------------------------------
# Flash attention: GQA via index_map, reads K/V straight from the cache layout
# (B, KVH, max_seq, D), in-kernel causal mask, clamped KV tile prefetch.
# ---------------------------------------------------------------------------

def _flash_attn_kernel(q_ref, k_ref, v_ref, o_ref, m_ref, l_ref, acc_ref, *,
                       scale, start_pos, kv_len):
    _, tq, _, n_rep, d = q_ref.shape
    tk = k_ref.shape[2]
    rows = tq * n_rep
    qi = pl.program_id(2)
    ki = pl.program_id(3)

    @pl.when(ki == 0)
    def _init():
        m_ref[...] = jnp.full_like(m_ref, -jnp.inf)
        l_ref[...] = jnp.zeros_like(l_ref)
        acc_ref[...] = jnp.zeros_like(acc_ref)

    # Last query position of this Q tile; tiles entirely in its causal future
    # are skipped (and, via the clamped index_map, not even fetched).
    q_last_pos = start_pos + qi * tq + (tq - 1)

    @pl.when(ki * tk <= q_last_pos)
    def _compute():
        # Pack all n_rep query heads of this KV group into one matmul
        # (tq * n_rep rows) so the MXU / 128-lane vregs are filled.
        q = q_ref[...].reshape(rows, d)
        k = k_ref[...].reshape(tk, d)
        v = v_ref[...].reshape(tk, d)

        s = jax.lax.dot_general(
            q.astype(_MXU_INPUT_DTYPE), k.astype(_MXU_INPUT_DTYPE),
            dimension_numbers=(((1,), (1,)), ((), ())),
            preferred_element_type=jnp.float32) * scale       # (rows, tk)

        # Causal + cache-length mask on the VPU (no dense HBM mask tensor).
        row = jax.lax.broadcasted_iota(jnp.int32, (rows, tk), 0)
        col = jax.lax.broadcasted_iota(jnp.int32, (rows, tk), 1)
        q_pos = start_pos + qi * tq + row // n_rep
        k_pos = ki * tk + col
        allowed = (k_pos <= q_pos) & (k_pos < kv_len)
        s = jnp.where(allowed, s, -jnp.inf)

        m_prev = m_ref[...]
        m_new = jnp.maximum(m_prev, jnp.max(s, axis=-1, keepdims=True))
        alpha = jnp.exp(m_prev - m_new)
        p = jnp.exp(s - m_new)
        l_ref[...] = alpha * l_ref[...] + jnp.sum(p, axis=-1, keepdims=True)
        acc_ref[...] = alpha * acc_ref[...] + jax.lax.dot_general(
            p.astype(_MXU_INPUT_DTYPE), v.astype(_MXU_INPUT_DTYPE),
            dimension_numbers=(((1,), (0,)), ((), ())),
            preferred_element_type=jnp.float32)
        m_ref[...] = m_new

    @pl.when(ki == pl.num_programs(3) - 1)
    def _finalize():
        inv_l = pl.reciprocal(l_ref[...], approx=True)
        o_ref[...] = (acc_ref[...] * inv_l).reshape(o_ref.shape).astype(o_ref.dtype)


def pallas_flash_attention(xq, cache_k, cache_v, start_pos, seqlen):
    """xq: (B, S, H, D); cache_k/v: (max_batch, KVH, max_seq, D) -> (B, S, H*D)."""
    B, S, H, D = xq.shape
    _, KVH, MS, _ = cache_k.shape
    n_rep = H // KVH
    kv_len = start_pos + seqlen
    scale = 1.0 / math.sqrt(D)

    tq = min(S, _ATTN_TQ)
    tk = min(MS, _ATTN_TK)
    nq = _cdiv(S, tq)
    nkv = _cdiv(kv_len, tk)          # only the live prefix is ever fetched

    # Group query heads by shared KV head -- a pure reshape, no transpose.
    q = xq.reshape(B, S, KVH, n_rep, D)

    def q_index_map(b, g, qi, ki):
        return (b, qi, g, 0, 0)

    def kv_index_map(b, g, qi, ki):
        # Clamp to the last causally-needed KV tile so fully-masked steps
        # re-request the same block (no redundant HBM fetch).
        last_blk = (start_pos + (qi + 1) * tq - 1) // tk
        return (b, g, jnp.minimum(ki, last_blk), 0)

    kernel = functools.partial(_flash_attn_kernel, scale=scale,
                               start_pos=start_pos, kv_len=kv_len)
    # TODO(synk): start_pos is a static Python int baked into index_maps/masks
    # (matches the reference decode loop) -- thread it via scalar prefetch to
    # avoid per-position recompiles in a real decode loop.

    out = pl.pallas_call(
        kernel,
        out_shape=jax.ShapeDtypeStruct((B, S, KVH, n_rep, D), xq.dtype),
        grid=(B, KVH, nq, nkv),
        in_specs=[
            pl.BlockSpec((1, tq, 1, n_rep, D), q_index_map),
            pl.BlockSpec((1, 1, tk, D), kv_index_map),
            pl.BlockSpec((1, 1, tk, D), kv_index_map),
        ],
        out_specs=pl.BlockSpec((1, tq, 1, n_rep, D), q_index_map),
        scratch_shapes=[
            pltpu.VMEM((tq * n_rep, 1), jnp.float32),   # running max m
            pltpu.VMEM((tq * n_rep, 1), jnp.float32),   # running sum l
            pltpu.VMEM((tq * n_rep, D), jnp.float32),   # output accumulator
        ],
        compiler_params=pltpu.CompilerParams(
            dimension_semantics=("parallel", "parallel", "parallel", "arbitrary"),
            vmem_limit_bytes=_VMEM_LIMIT_BYTES,
        ),
        cost_estimate=pl.CostEstimate(
            flops=4 * B * H * S * kv_len * D,
            transcendentals=B * H * S * kv_len,
            bytes_accessed=2 * (2 * B * S * H * D + 2 * B * KVH * kv_len * D),
        ),
    )(q, cache_k, cache_v)

    return out.reshape(B, S, H * D)


# ---------------------------------------------------------------------------
# KV-cache writeback: single manual HBM->HBM DMA into the aliased cache buffer
# ---------------------------------------------------------------------------

def pallas_kv_cache_update(cache, new_t, start_pos):
    """new_t: (B, KVH, S, D) written into cache[:B, :, start_pos:start_pos+S]."""
    B, KVH, S, D = new_t.shape

    def kernel(new_ref, cache_in_ref, cache_out_ref, sem):
        del cache_in_ref  # present only so the cache buffer aliases the output
        cp = pltpu.make_async_copy(
            new_ref,
            cache_out_ref.at[pl.ds(0, B), :, pl.ds(start_pos, S), :],
            sem)
        cp.start()
        cp.wait()

    return pl.pallas_call(
        kernel,
        out_shape=jax.ShapeDtypeStruct(cache.shape, cache.dtype),
        in_specs=[pl.BlockSpec(memory_space=pl.ANY),
                  pl.BlockSpec(memory_space=pl.ANY)],
        out_specs=pl.BlockSpec(memory_space=pl.ANY),
        scratch_shapes=[pltpu.SemaphoreType.DMA],
        input_output_aliases={1: 0},
    )(new_t, cache)


# ---------------------------------------------------------------------------
# Plain-JAX glue (RoPE, freqs)
# ---------------------------------------------------------------------------

def apply_scaling(freqs):
    scale_factor = 8.0
    low_freq_factor = 1.0
    high_freq_factor = 4.0
    old_context_len = 8192.0
    low_freq_wavelen = old_context_len / low_freq_factor
    high_freq_wavelen = old_context_len / high_freq_factor
    wavelen = 2.0 * math.pi / freqs
    smooth = (old_context_len / wavelen - low_freq_factor) / (
        high_freq_factor - low_freq_factor)
    mid = (1.0 - smooth) * freqs / scale_factor + smooth * freqs
    return jnp.where(wavelen < high_freq_wavelen, freqs,
                     jnp.where(wavelen > low_freq_wavelen, freqs / scale_factor, mid))


def precompute_freqs_cis(dim, end, theta=10000.0, use_scaled=False):
    freqs = 1.0 / (theta ** (jnp.arange(0, dim, 2)[: dim // 2].astype(jnp.float32) / dim))
    if use_scaled:
        freqs = apply_scaling(freqs)
    t = jnp.arange(end, dtype=jnp.float32)
    freqs = jnp.outer(t, freqs)
    return jax.lax.complex(jnp.cos(freqs), jnp.sin(freqs))   # polar(1, freqs)


def apply_rotary_emb(xq, xk, freqs_cis):
    # xq: (B, S, H, D), xk: (B, S, KVH, D); freqs_cis: (S, D//2) complex
    def rot(x):
        xs = x.astype(jnp.float32).reshape(*x.shape[:-1], -1, 2)
        xc = jax.lax.complex(xs[..., 0], xs[..., 1])
        fc = freqs_cis.reshape(1, xc.shape[1], 1, xc.shape[-1])
        xo = xc * fc
        out = jnp.stack([jnp.real(xo), jnp.imag(xo)], axis=-1).reshape(x.shape)
        return out.astype(x.dtype)

    return rot(xq), rot(xk)


# ---------------------------------------------------------------------------
# Model forward
# ---------------------------------------------------------------------------

def attention_forward(p, cfg, x, start_pos, freqs_cis, layer_id, cache_k, cache_v):
    bsz, seqlen, dim = x.shape
    H, KVH, hd = cfg["n_heads"], cfg["n_kv_heads"], cfg["head_dim"]
    xf = x.reshape(-1, dim)

    # Fused QKV projection: one pass over x, wider N for the MXU.
    qkv = pallas_matmul(xf, p["wqkv"])                  # (M, (H + 2*KVH) * hd)
    q_end = H * hd
    k_end = q_end + KVH * hd
    xq = qkv[:, :q_end].reshape(bsz, seqlen, H, hd)
    xk = qkv[:, q_end:k_end].reshape(bsz, seqlen, KVH, hd)
    xv = qkv[:, k_end:].reshape(bsz, seqlen, KVH, hd)

    xq, xk = apply_rotary_emb(xq, xk, freqs_cis)

    # New keys/values -> cache layout (B, KVH, S, D); only the *new* tokens are
    # transposed (tiny), the full-prefix cache is never copied or transposed.
    xk_t = xk.transpose(0, 2, 1, 3)
    xv_t = xv.transpose(0, 2, 1, 3)
    cache_k = pallas_kv_cache_update(cache_k, xk_t, start_pos)
    cache_v = pallas_kv_cache_update(cache_v, xv_t, start_pos)

    # TODO(synk): the sine-wave score amplification (layer_id > 25) and the
    # matplotlib/seaborn heatmap dump (layer_id == 27) never execute for
    # n_layers <= 26 and have no Pallas equivalent (host-side file I/O).
    del layer_id

    # Flash attention: reads K/V straight from the (B, KVH, max_seq, D) cache,
    # causal mask in-kernel, GQA via index_map, n_rep heads packed per step.
    out = pallas_flash_attention(xq, cache_k, cache_v, start_pos, seqlen)
    out = pallas_matmul(out.reshape(-1, H * hd), p["wo"]).reshape(bsz, seqlen, dim)
    return out, cache_k, cache_v


def feed_forward(p, x):
    shape = x.shape
    xf = x.reshape(-1, shape[-1])
    g = pallas_gate_matmul(xf, p["w1"], p["w3"])        # silu(x@w1) * (x@w3)
    return pallas_matmul(g, p["w2"]).reshape(shape)


def transformer_block(p, cfg, x, start_pos, freqs_cis, layer_id, cache_k, cache_v):
    attn_in = pallas_rmsnorm(x, p["attention_norm"], cfg["norm_eps"])
    attn_out, cache_k, cache_v = attention_forward(
        p, cfg, attn_in, start_pos, freqs_cis, layer_id, cache_k, cache_v)
    # Residual add fused with the ffn RMSNorm (one extra HBM pass saved).
    h, ffn_in = pallas_add_rmsnorm(x, attn_out, p["ffn_norm"], cfg["norm_eps"])
    out = h + feed_forward(p, ffn_in)
    return out, cache_k, cache_v


def transformer_forward(params, cfg, freqs_cis_all, tokens, start_pos,
                        system_prompt_tokens, mitigate_adversal_prompt):
    bsz, seqlen = tokens.shape
    h = params["tok_embeddings"][tokens]                         # (B, S, dim) bf16
    system_emb = params["tok_embeddings"][system_prompt_tokens]  # as in reference

    freqs_cis = freqs_cis_all[start_pos: start_pos + seqlen]

    # The dense causal mask of the reference (triu(-inf) hstacked with zeros
    # for the cached prefix) is generated inside the attention kernel from
    # iota + program_id, so no (S, Skv) mask tensor is streamed from HBM.

    caches = params["caches"]
    new_caches = []
    for layer_id in range(cfg["n_layers"]):
        if seqlen > 1 and mitigate_adversal_prompt:
            # Faithful to reference: system prompt embeddings are padded /
            # truncated but never applied to h (no effect on output).
            if system_emb.shape[1] != h.shape[1]:
                if system_emb.shape[1] < h.shape[1]:
                    diff = h.shape[1] - system_emb.shape[1]
                    system_emb = jnp.pad(system_emb, ((0, 0), (0, diff), (0, 0)))
                else:
                    system_emb = system_emb[:, : h.shape[1], :]
        ck, cv = caches[layer_id]
        h, ck, cv = transformer_block(
            params["layers"][layer_id], cfg, h, start_pos, freqs_cis,
            layer_id, ck, cv)
        new_caches.append((ck, cv))

    h = pallas_rmsnorm(h, params["norm"], cfg["norm_eps"])
    logits = pallas_matmul(h.reshape(-1, cfg["dim"]), params["output"],
                           out_dtype=jnp.float32)
    logits = logits.reshape(bsz, seqlen, cfg["vocab_size"]).astype(jnp.float32)
    return logits, new_caches


# ---------------------------------------------------------------------------
# Deterministic parameter initialization
# ---------------------------------------------------------------------------

def ffn_hidden_dim(dim, multiple_of, ffn_dim_multiplier=None):
    hidden = 4 * dim
    hidden = int(2 * hidden / 3)
    if ffn_dim_multiplier is not None:
        hidden = int(ffn_dim_multiplier * hidden)
    hidden = multiple_of * ((hidden + multiple_of - 1) // multiple_of)
    return hidden


def init_params(key, cfg):
    dim = cfg["dim"]
    H, KVH, hd = cfg["n_heads"], cfg["n_kv_heads"], cfg["head_dim"]
    hidden = ffn_hidden_dim(dim, cfg["multiple_of"])
    vocab = cfg["vocab_size"]

    def w(k, shape, scale=0.02):
        return (scale * jax.random.normal(k, shape, dtype=jnp.float32)
                ).astype(_PARAM_DTYPE)

    keys = jax.random.split(key, 2 + cfg["n_layers"])
    params = {
        "tok_embeddings": w(keys[0], (vocab, dim)),
        "output": w(keys[1], (dim, vocab)),
        "norm": jnp.ones((dim,), jnp.float32),
        "layers": [],
        "caches": [],
    }
    for li in range(cfg["n_layers"]):
        lk = jax.random.split(keys[2 + li], 7)
        wq = w(lk[0], (dim, H * hd))
        wk = w(lk[1], (dim, KVH * hd))
        wv = w(lk[2], (dim, KVH * hd))
        params["layers"].append({
            "wqkv": jnp.concatenate([wq, wk, wv], axis=1),   # fused QKV weight
            "wo": w(lk[3], (H * hd, dim)),
            "w1": w(lk[4], (dim, hidden)),
            "w3": w(lk[5], (dim, hidden)),
            "w2": w(lk[6], (hidden, dim)),
            "attention_norm": jnp.ones((dim,), jnp.float32),
            "ffn_norm": jnp.ones((dim,), jnp.float32),
        })
        # KV cache stored in (max_batch, KVH, max_seq, head_dim) bf16.
        params["caches"].append((
            jnp.zeros((cfg["max_batch_size"], KVH, cfg["max_seq_len"], hd),
                      _PARAM_DTYPE),
            jnp.zeros((cfg["max_batch_size"], KVH, cfg["max_seq_len"], hd),
                      _PARAM_DTYPE),
        ))
    return params


# ---------------------------------------------------------------------------
# Demo
# ---------------------------------------------------------------------------

if __name__ == "__main__":
    cfg = dict(
        dim=64,
        n_heads=4,
        n_kv_heads=2,
        head_dim=16,          # dim // n_heads
        n_layers=2,
        vocab_size=128,
        multiple_of=32,
        norm_eps=1e-6,
        max_batch_size=2,
        max_seq_len=16,
        rope_theta=500000.0,
        use_scaled_rope=False,
    )

    key = jax.random.PRNGKey(0)
    params = init_params(key, cfg)
    freqs_cis_all = precompute_freqs_cis(
        cfg["head_dim"], cfg["max_seq_len"] * 2, cfg["rope_theta"],
        cfg["use_scaled_rope"])

    bsz, seqlen = 2, 8
    tokens = jax.random.randint(jax.random.PRNGKey(1), (bsz, seqlen), 0,
                                cfg["vocab_size"], dtype=jnp.int32)
    system_tokens = jax.random.randint(jax.random.PRNGKey(2), (bsz, 4), 0,
                                       cfg["vocab_size"], dtype=jnp.int32)
    start_pos = 0

    logits, new_caches = transformer_forward(
        params, cfg, freqs_cis_all, tokens, start_pos, system_tokens,
        mitigate_adversal_prompt=True)
    logits = jax.block_until_ready(logits)

    assert logits.shape == (bsz, seqlen, cfg["vocab_size"])
    assert logits.dtype == jnp.float32
    assert bool(jnp.all(jnp.isfinite(logits)))
    print("KERNEL_OK")
</pallas_src>

<mosaic_0001>
module attributes {stable_mosaic.version = 11 : i64} {
  func.func @_rmsnorm_kernel(%arg0: i32, %arg1: memref<16x64xbf16, #tpu.memory_space<vmem>>, %arg2: memref<1x64xf32, #tpu.memory_space<vmem>>, %arg3: memref<16x64xbf16, #tpu.memory_space<vmem>>) attributes {dimension_semantics = [#tpu.dimension_semantics<parallel>], iteration_bounds = array<i64: 1>, scalar_prefetch = 0 : i64, scratch_operands = 0 : i64, tpu.core_type = #tpu.core_type<tc>, window_params = [{transform_indices = @transform_0, window_bounds = array<i64: 16, 64>}, {pipeline_mode = #tpu.pipeline_mode<synchronous>, transform_indices = @transform_1, window_bounds = array<i64: 1, 64>}, {transform_indices = @transform_2, window_bounds = array<i64: 16, 64>}]} {
    %c0 = arith.constant 0 : index
    %c0_0 = arith.constant 0 : index
    %0 = vector.load %arg1[%c0, %c0_0] : memref<16x64xbf16, #tpu.memory_space<vmem>>, vector<16x64xbf16>
    %1 = arith.extf %0 : vector<16x64xbf16> to vector<16x64xf32>
    %2 = arith.mulf %1, %1 : vector<16x64xf32>
    %cst = arith.constant dense<0.000000e+00> : vector<16xf32>
    %3 = vector.multi_reduction <add>, %2, %cst [1] : vector<16x64xf32> to vector<16xf32>
    %4 = vector.shape_cast %3 : vector<16xf32> to vector<16x1xf32>
    %cst_1 = arith.constant 6.400000e+01 : f32
    %5 = vector.broadcast %cst_1 : f32 to vector<16x1xf32>
    %6 = arith.divf %4, %5 : vector<16x1xf32>
    %cst_2 = arith.constant 9.99999997E-7 : f32
    %7 = vector.broadcast %cst_2 : f32 to vector<16x1xf32>
    %8 = arith.addf %6, %7 : vector<16x1xf32>
    %9 = math.rsqrt %8 : vector<16x1xf32>
    %10 = vector.broadcast %9 : vector<16x1xf32> to vector<16x64xf32>
    %11 = arith.mulf %1, %10 : vector<16x64xf32>
    %c0_3 = arith.constant 0 : index
    %c0_4 = arith.constant 0 : index
    %12 = vector.load %arg2[%c0_3, %c0_4] : memref<1x64xf32, #tpu.memory_space<vmem>>, vector<1x64xf32>
    %13 = vector.broadcast %12 : vector<1x64xf32> to vector<16x64xf32>
    %14 = arith.mulf %11, %13 : vector<16x64xf32>
    %15 = arith.truncf %14 : vector<16x64xf32> to vector<16x64xbf16>
    %c0_5 = arith.constant 0 : index
    %c0_6 = arith.constant 0 : index
    %16 = vector.load %arg3[%c0_5, %c0_6] : memref<16x64xbf16, #tpu.memory_space<vmem>>, vector<16x64xbf16>
    tpu.vector_store %arg3[%c0_5, %c0_6], %15 {strides = array<i32>} : memref<16x64xbf16, #tpu.memory_space<vmem>>, vector<16x64xbf16>,
    return
  }
  func.func @transform_0(%arg0: i32) -> (i32, i32) {
    %c0_i32 = arith.constant 0 : i32
    %c0_i32_0 = arith.constant 0 : i32
    return %arg0, %c0_i32 : i32, i32
  }
  func.func @transform_1(%arg0: i32) -> (i32, i32) {
    %c0_i32 = arith.constant 0 : i32
    %c0_i32_0 = arith.constant 0 : i32
    %c0_i32_1 = arith.constant 0 : i32
    return %c0_i32, %c0_i32_0 : i32, i32
  }
  func.func @transform_2(%arg0: i32) -> (i32, i32) {
    %c0_i32 = arith.constant 0 : i32
    %c0_i32_0 = arith.constant 0 : i32
    return %arg0, %c0_i32 : i32, i32
  }
}

</mosaic_0001>

<llo_original>
// kernel: tpu_custom_call.1
$region0: #{tpu_custom_call.1}
  #allocation0 [shape = 'u32[]', space=smem, size = 0x4, offset = 0x4, fixed_abs, tag = 'smem constant byte address 0x4 - core index']
  #allocation1 [shape = 'u32[144,128]{1,0:T(1,128)}', space=vmem, size = 0x12000, scoped, tag = 'internal scratch']
  %s0 = inlined_call_operand.hbm [shape: bf16[16,64], index: 0, kind: input, shape index: {}]
  %s1 = inlined_call_operand.vmem [shape: f32[1,64], index: 1, kind: input, shape index: {}]
  %s2 = inlined_call_operand.hbm [shape: bf16[16,64], index: 2, kind: output, shape index: {}]
  %s3 = sld [smem:[#allocation0]]
  $region22: #{tpu_custom_call.1} parent=0
    _
  %s5 = ssub.s32 1, %s3
  %s6 = scalar_select 0, %s5, %s3
  $region1: #{tpu_custom_call.1} parent=0
    #allocation2 [shape = 'u8[4096]{0}', space=vmem, size = 0x1000, scoped, tag = 'input window, operand 0, single buffered']
    #allocation3 [shape = 's32[1]{0}', space=sflag, size = 0x4, scoped, tag = 'scoped memory for tpu_custom_call.1']
    #allocation4 [shape = 's32[1]{0}', space=sflag, size = 0x4, scoped, tag = 'scoped memory for tpu_custom_call.1']
    #allocation5 [shape = 'u8[4096]{0}', space=vmem, size = 0x1000, scoped, tag = 'output window, operand 0, single buffered']
    %7 = vsyncpa [#allocation3], 0
    %8 = vsyncpa [#allocation4], 0
    // Predicated region
    $region2: #{tpu_custom_call.1} parent=1 // pred_check
      _
    $region3: #{tpu_custom_call.1} parent=1 // pred_check_branch
      %10 = sbr.rel (0) target = $region5
    $region4: #{tpu_custom_call.1} parent=1 // pred_region
      %s12 = ssub.s32 128, 128
      %13 = vsyncadd [#allocation3], %s12
      %s14 = sshll.u32 [#allocation2], 4
      %s15 = int_to_ptr.vmem [resolvable:$true] %s14
      %20 = dma.hbm_to_vmem [thread:$0]  %s0, 128, %s15, [#allocation3], 64, 64, 4
    $region5: #{tpu_custom_call.1} parent=1 // pred_fallthru
      _
    // Predicated region
    $region6: #{tpu_custom_call.1} parent=1 // pred_check
      _
    $region7: #{tpu_custom_call.1} parent=1 // pred_check_branch
      %22 = sbr.rel (0) target = $region9
    $region8: #{tpu_custom_call.1} parent=1 // pred_region
      _
    $region9: #{tpu_custom_call.1} parent=1 // pred_fallthru
      _
    // Predicated region
    $region10: #{tpu_custom_call.1} parent=1 // pred_check
      _
    $region11: #{tpu_custom_call.1} parent=1 // pred_check_branch
      %24 = sbr.rel (0) target = $region13
    $region12: #{tpu_custom_call.1} parent=1 // pred_region
      %25 = dma.done [#allocation3], 128
    $region13: #{tpu_custom_call.1} parent=1 // pred_fallthru
      _
    %v26 = vld [vmem:[#allocation2] sm:$0xf]
    %v27 = vld [vmem:[#allocation2 + $0x4] sm:$0xf]
    %v28 = vunpack.c.l.bf16 %v26
    %v29 = vunpack.c.l.bf16 %v27
    %v30 = vmul.f32 %v28, %v28
    %v31 = vmul.f32 %v29, %v29
    %vm32 = vcmask 523264
    %v33 = vsel %vm32, %v30, 0.0
    %34 = vadd.xlane.f32.xlu0 %v33
    %v35 = vpop.xlane.xlu0 %34
    %v36 = vsel %vm32, %v31, 0.0
    %37 = vadd.xlane.f32.xlu0 %v36
    %v38 = vpop.xlane.xlu0 %37
    %v39 = vrcp.pop 64.0
    %v40 = vmul.f32 %v35, %v39
    %v41 = vmul.f32 %v38, %v39
    %v42 = vadd.f32 %v40, 1e-06
    %v43 = vadd.f32 %v41, 1e-06
    %v44 = vrsqrt.pop %v42
    %v45 = vrsqrt.pop %v43
    %v46 = vmul.f32 %v28, %v44
    %v47 = vmul.f32 %v29, %v45
    %v48 = vld [vmem:[%s1] sm:$0x1]
    %v50 = vlaneseq
    %v51 = vshrl.u32 %v50, 7
    %v52 = vsub.s32 0, %v51
    %v53 = vrot.slane %v48, %v52
    %v55 = vmul.f32 %v46, %v53
    %v56 = vmul.f32 %v47, %v53
    %v57 = vpack.c.bf16 %v56, %v55
    %v59 = vunpack.c.l.b16 %v57
    %v60 = vunpack.c.h.b16 %v57
    %v61 = vpack.c.b16 %v59, %v59
    %v62 = vpack.c.b16 %v60, %v60
    %vm65 = vcmask 519168
    %66 = vst.msk [vmem:[#allocation5] sm:$0xf] %vm65, %v61
    %67 = vst.msk [vmem:[#allocation5 + $0x4] sm:$0xf] %vm65, %v62
    // Predicated region
    $region14: #{tpu_custom_call.1} parent=1 // pred_check
      _
    $region15: #{tpu_custom_call.1} parent=1 // pred_check_branch
      %69 = sbr.rel (0) target = $region17
    $region16: #{tpu_custom_call.1} parent=1 // pred_region
      %s71 = ssub.s32 128, 128
      %72 = vsyncadd [#allocation4], %s71
      %s73 = sshll.u32 [#allocation5], 4
      %s74 = int_to_ptr.vmem [resolvable:$true] %s73
      %79 = dma.vmem_to_hbm [thread:$0]  %s74, 128, %s2, [#allocation4], 64, 64, 4
    $region17: #{tpu_custom_call.1} parent=1 // pred_fallthru
      _
    // Predicated region
    $region18: #{tpu_custom_call.1} parent=1 // pred_check
      _
    $region19: #{tpu_custom_call.1} parent=1 // pred_check_branch
      %81 = sbr.rel (0) target = $region21
    $region20: #{tpu_custom_call.1} parent=1 // pred_region
      %82 = dma.done [#allocation4], 128
    $region21: #{tpu_custom_call.1} parent=1 // pred_fallthru
      _
    %83 = vsyncpa [#allocation3], 1
    %84 = vsyncpa [#allocation4], 1

</llo_original>
